<compile_context>
chip_gen: v6e
topology: v6e:2x2x1
jax: 0.10.0
libtpu: 0.0.40
codegen_flags: <defaults>
</compile_context>

<pallas_src>
import functools

import jax
import jax.numpy as jnp
from jax.experimental import pallas as pl
from jax.experimental.pallas import tpu as pltpu

_BN_EPS = 1e-5


def _simple_seg_head_kernel(x_ref, w1_ref, b1_ref, wo_ref, out_ref, *, H, W):
    # x_ref:  (Cin, H*W)   one batch element, channels-first, spatial flattened
    # w1_ref: (Cmid, 9*Cin) BN-folded fused 3x3 conv weight (tap-major along K)
    # b1_ref: (Cmid, 1)     BN-folded bias
    # wo_ref: (ncls, Cmid)  1x1 conv_out weight (no bias)
    # out_ref:(ncls, H*W)
    HW = H * W
    x = x_ref[...].astype(jnp.float32)                       # (Cin, HW)

    # Flat spatial index -> (h, w) coordinates, computed on the VPU in f32
    # (avoids vector integer div/mod; exact for any realistic H*W).
    p = jax.lax.broadcasted_iota(jnp.int32, (1, HW), 1).astype(jnp.float32)
    h_idx = jnp.floor((p + 0.5) * (1.0 / W))                  # (1, HW), integer-valued
    w_idx = p - h_idx * W                                     # (1, HW), integer-valued

    # Build the 9 shifted taps of the 3x3 conv via lane rolls + boundary masks.
    taps = []
    for dh in (-1, 0, 1):
        for dw in (-1, 0, 1):
            d = dh * W + dw                                   # flat offset of the tap
            s = x if d == 0 else pltpu.roll(x, (-d) % HW, axis=1)
            conds = []
            if dh == -1:
                conds.append(h_idx >= 1.0)
            if dh == 1:
                conds.append(h_idx <= H - 2.0)
            if dw == -1:
                conds.append(w_idx >= 1.0)
            if dw == 1:
                conds.append(w_idx <= W - 2.0)
            if conds:
                m = conds[0]
                for c in conds[1:]:
                    m = jnp.logical_and(m, c)
                s = jnp.where(m, s, 0.0)                      # zero-pad semantics
            taps.append(s)
    xs = jnp.concatenate(taps, axis=0)                        # (9*Cin, HW)

    # Conv(3x3) + BN (folded) + ReLU as a single MXU matmul.
    h1 = jnp.dot(w1_ref[...], xs, preferred_element_type=jnp.float32) + b1_ref[...]
    h1 = jnp.maximum(h1, 0.0)                                 # (Cmid, HW)

    # conv_out: 1x1, bias=False.
    out = jnp.dot(wo_ref[...], h1, preferred_element_type=jnp.float32)  # (ncls, HW)
    out_ref[...] = out.astype(out_ref.dtype)


def simple_seg_head_forward(x_nchw, w_fused, b_fused, w_out):
    """x_nchw: (B, C, H, W) float32. Returns (B, num_classes, H, W)."""
    B, C, H, W = x_nchw.shape
    HW = H * W
    Cmid = w_fused.shape[0]
    ncls = w_out.shape[0]

    x_flat = x_nchw.reshape(B, C, HW)     # metadata-only reshape, no HBM transpose

    kernel = functools.partial(_simple_seg_head_kernel, H=H, W=W)
    out_flat = pl.pallas_call(
        kernel,
        out_shape=jax.ShapeDtypeStruct((B, ncls, HW), jnp.float32),
        grid=(B,),
        in_specs=[
            pl.BlockSpec((None, C, HW), lambda b: (b, 0, 0)),     # per-batch activations
            pl.BlockSpec((Cmid, 9 * C), lambda b: (0, 0)),        # fused conv weight
            pl.BlockSpec((Cmid, 1), lambda b: (0, 0)),            # folded bias
            pl.BlockSpec((ncls, Cmid), lambda b: (0, 0)),         # 1x1 conv_out weight
        ],
        out_specs=pl.BlockSpec((None, ncls, HW), lambda b: (b, 0, 0)),
        compiler_params=pltpu.CompilerParams(dimension_semantics=("parallel",)),
    )(x_flat, w_fused, b_fused, w_out)

    return out_flat.reshape(B, ncls, H, W)    # metadata-only reshape


# ------------------------- plain-JAX glue / reference -------------------------

def fold_conv3x3_bn(w, b, gamma, beta, mean, var, eps=_BN_EPS):
    """w: (Cout, Cin, 3, 3) torch OIHW layout.
    Returns the BN-folded fused weight (Cout, 9*Cin) with K index = (kh*3+kw)*Cin + ci
    (matching the kernel's tap order) and the folded bias (Cout, 1)."""
    scale = gamma / jnp.sqrt(var + eps)
    w_f = w * scale[:, None, None, None]
    b_f = (b - mean) * scale + beta
    cout, cin = w.shape[0], w.shape[1]
    w_fused = jnp.transpose(w_f, (0, 2, 3, 1)).reshape(cout, 9 * cin)
    return w_fused.astype(jnp.float32), b_f.reshape(cout, 1).astype(jnp.float32)


def reference_forward(x, w1, b1, gamma, beta, mean, var, wo):
    """Pure-JAX reference of SimpleSegHead.forward (eval-mode BN)."""
    y = jax.lax.conv_general_dilated(
        x, w1, window_strides=(1, 1), padding=((1, 1), (1, 1)),
        dimension_numbers=("NCHW", "OIHW", "NCHW"))
    y = y + b1[None, :, None, None]
    scale = gamma / jnp.sqrt(var + _BN_EPS)
    y = (y - mean[None, :, None, None]) * scale[None, :, None, None] + beta[None, :, None, None]
    y = jnp.maximum(y, 0.0)
    out = jnp.einsum("bchw,oc->bohw", y, wo[:, :, 0, 0])   # 1x1 conv, bias=False
    return out


if __name__ == "__main__":
    # Small shapes consistent with SimpleSegHead(in_channels, mid_channels, num_classes).
    B, C_in, H, W = 2, 4, 16, 16
    mid_channels = 32
    num_classes = 4

    key = jax.random.PRNGKey(0)
    ks = iter(jax.random.split(key, 16))

    def nrm(shape, scale=0.1):
        return scale * jax.random.normal(next(ks), shape, jnp.float32)

    x = jax.random.normal(next(ks), (B, C_in, H, W), jnp.float32)

    # Conv2d(3x3) params + BatchNorm2d(eval) running stats.
    w1 = nrm((mid_channels, C_in, 3, 3))
    b1 = nrm((mid_channels,))
    gamma = 1.0 + 0.1 * jax.random.normal(next(ks), (mid_channels,), jnp.float32)
    beta = nrm((mid_channels,))
    mean = nrm((mid_channels,))
    var = 0.5 + jax.random.uniform(next(ks), (mid_channels,), jnp.float32)
    # conv_out: 1x1, bias=False.
    wo = nrm((num_classes, mid_channels, 1, 1))

    # Fold BN into the 3x3 conv (eval mode); reshape the 1x1 conv to (ncls, Cmid).
    w_fused, b_fused = fold_conv3x3_bn(w1, b1, gamma, beta, mean, var)
    wo_k = wo[:, :, 0, 0].astype(jnp.float32)

    out = simple_seg_head_forward(x, w_fused, b_fused, wo_k)
    out = jax.block_until_ready(out)

    ref = reference_forward(x, w1, b1, gamma, beta, mean, var, wo)

    assert out.shape == (B, num_classes, H, W), out.shape
    max_err = float(jnp.max(jnp.abs(out - ref)))
    assert jnp.allclose(out, ref, atol=1e-3, rtol=1e-3), max_err

    print("KERNEL_OK")
</pallas_src>

<mosaic_0001>
module attributes {stable_mosaic.version = 11 : i64} {
  func.func @_simple_seg_head_kernel(%arg0: i32, %arg1: memref<1x4x256xf32, #tpu.memory_space<vmem>>, %arg2: memref<32x36xf32, #tpu.memory_space<vmem>>, %arg3: memref<32x1xf32, #tpu.memory_space<vmem>>, %arg4: memref<4x32xf32, #tpu.memory_space<vmem>>, %arg5: memref<1x4x256xf32, #tpu.memory_space<vmem>>) attributes {dimension_semantics = [#tpu.dimension_semantics<parallel>], iteration_bounds = array<i64: 2>, scalar_prefetch = 0 : i64, scratch_operands = 0 : i64, tpu.core_type = #tpu.core_type<tc>, window_params = [{transform_indices = @transform_0, window_bounds = array<i64: 1, 4, 256>}, {pipeline_mode = #tpu.pipeline_mode<synchronous>, transform_indices = @transform_1, window_bounds = array<i64: 32, 36>}, {pipeline_mode = #tpu.pipeline_mode<synchronous>, transform_indices = @transform_2, window_bounds = array<i64: 32, 1>}, {pipeline_mode = #tpu.pipeline_mode<synchronous>, transform_indices = @transform_3, window_bounds = array<i64: 4, 32>}, {transform_indices = @transform_4, window_bounds = array<i64: 1, 4, 256>}]} {
    %c0 = arith.constant 0 : index
    %c0_0 = arith.constant 0 : index
    %c0_1 = arith.constant 0 : index
    %0 = vector.load %arg1[%c0, %c0_0, %c0_1] : memref<1x4x256xf32, #tpu.memory_space<vmem>>, vector<1x4x256xf32>
    %1 = vector.shape_cast %0 : vector<1x4x256xf32> to vector<4x256xf32>
    %2 = tpu.iota {dimensions = array<i32: 1>} : vector<1x256xi32>
    %3 = arith.sitofp %2 : vector<1x256xi32> to vector<1x256xf32>
    %cst = arith.constant 5.000000e-01 : f32
    %4 = vector.broadcast %cst : f32 to vector<1x256xf32>
    %5 = arith.addf %3, %4 : vector<1x256xf32>
    %cst_2 = arith.constant 6.250000e-02 : f32
    %6 = vector.broadcast %cst_2 : f32 to vector<1x256xf32>
    %7 = arith.mulf %5, %6 : vector<1x256xf32>
    %8 = math.floor %7 : vector<1x256xf32>
    %cst_3 = arith.constant 1.600000e+01 : f32
    %9 = vector.broadcast %cst_3 : f32 to vector<1x256xf32>
    %10 = arith.mulf %8, %9 : vector<1x256xf32>
    %11 = arith.subf %3, %10 : vector<1x256xf32>
    %c17_i32 = arith.constant 17 : i32
    %12 = tpu.dynamic_rotate %1 by %c17_i32 dim 1 : vector<4x256xf32>, i32 -> vector<4x256xf32>
    %cst_4 = arith.constant 1.000000e+00 : f32
    %13 = vector.broadcast %cst_4 : f32 to vector<1x256xf32>
    %14 = arith.cmpf oge, %8, %13 : vector<1x256xf32>
    %cst_5 = arith.constant 1.000000e+00 : f32
    %15 = vector.broadcast %cst_5 : f32 to vector<1x256xf32>
    %16 = arith.cmpf oge, %11, %15 : vector<1x256xf32>
    %17 = arith.andi %14, %16 : vector<1x256xi1>
    %cst_6 = arith.constant 0.000000e+00 : f32
    %18 = vector.shape_cast %17 : vector<1x256xi1> to vector<1x256xi1>
    %19 = vector.broadcast %18 : vector<1x256xi1> to vector<4x256xi1>
    %20 = vector.broadcast %cst_6 : f32 to vector<4x256xf32>
    %21 = arith.select %19, %12, %20 : vector<4x256xi1>, vector<4x256xf32>
    %c16_i32 = arith.constant 16 : i32
    %22 = tpu.dynamic_rotate %1 by %c16_i32 dim 1 : vector<4x256xf32>, i32 -> vector<4x256xf32>
    %cst_7 = arith.constant 1.000000e+00 : f32
    %23 = vector.broadcast %cst_7 : f32 to vector<1x256xf32>
    %24 = arith.cmpf oge, %8, %23 : vector<1x256xf32>
    %cst_8 = arith.constant 0.000000e+00 : f32
    %25 = vector.shape_cast %24 : vector<1x256xi1> to vector<1x256xi1>
    %26 = vector.broadcast %25 : vector<1x256xi1> to vector<4x256xi1>
    %27 = vector.broadcast %cst_8 : f32 to vector<4x256xf32>
    %28 = arith.select %26, %22, %27 : vector<4x256xi1>, vector<4x256xf32>
    %c15_i32 = arith.constant 15 : i32
    %29 = tpu.dynamic_rotate %1 by %c15_i32 dim 1 : vector<4x256xf32>, i32 -> vector<4x256xf32>
    %cst_9 = arith.constant 1.000000e+00 : f32
    %30 = vector.broadcast %cst_9 : f32 to vector<1x256xf32>
    %31 = arith.cmpf oge, %8, %30 : vector<1x256xf32>
    %cst_10 = arith.constant 1.400000e+01 : f32
    %32 = vector.broadcast %cst_10 : f32 to vector<1x256xf32>
    %33 = arith.cmpf ole, %11, %32 : vector<1x256xf32>
    %34 = arith.andi %31, %33 : vector<1x256xi1>
    %cst_11 = arith.constant 0.000000e+00 : f32
    %35 = vector.shape_cast %34 : vector<1x256xi1> to vector<1x256xi1>
    %36 = vector.broadcast %35 : vector<1x256xi1> to vector<4x256xi1>
    %37 = vector.broadcast %cst_11 : f32 to vector<4x256xf32>
    %38 = arith.select %36, %29, %37 : vector<4x256xi1>, vector<4x256xf32>
    %c1_i32 = arith.constant 1 : i32
    %39 = tpu.dynamic_rotate %1 by %c1_i32 dim 1 : vector<4x256xf32>, i32 -> vector<4x256xf32>
    %cst_12 = arith.constant 1.000000e+00 : f32
    %40 = vector.broadcast %cst_12 : f32 to vector<1x256xf32>
    %41 = arith.cmpf oge, %11, %40 : vector<1x256xf32>
    %cst_13 = arith.constant 0.000000e+00 : f32
    %42 = vector.shape_cast %41 : vector<1x256xi1> to vector<1x256xi1>
    %43 = vector.broadcast %42 : vector<1x256xi1> to vector<4x256xi1>
    %44 = vector.broadcast %cst_13 : f32 to vector<4x256xf32>
    %45 = arith.select %43, %39, %44 : vector<4x256xi1>, vector<4x256xf32>
    %c255_i32 = arith.constant 255 : i32
    %46 = tpu.dynamic_rotate %1 by %c255_i32 dim 1 : vector<4x256xf32>, i32 -> vector<4x256xf32>
    %cst_14 = arith.constant 1.400000e+01 : f32
    %47 = vector.broadcast %cst_14 : f32 to vector<1x256xf32>
    %48 = arith.cmpf ole, %11, %47 : vector<1x256xf32>
    %cst_15 = arith.constant 0.000000e+00 : f32
    %49 = vector.shape_cast %48 : vector<1x256xi1> to vector<1x256xi1>
    %50 = vector.broadcast %49 : vector<1x256xi1> to vector<4x256xi1>
    %51 = vector.broadcast %cst_15 : f32 to vector<4x256xf32>
    %52 = arith.select %50, %46, %51 : vector<4x256xi1>, vector<4x256xf32>
    %c241_i32 = arith.constant 241 : i32
    %53 = tpu.dynamic_rotate %1 by %c241_i32 dim 1 : vector<4x256xf32>, i32 -> vector<4x256xf32>
    %cst_16 = arith.constant 1.400000e+01 : f32
    %54 = vector.broadcast %cst_16 : f32 to vector<1x256xf32>
    %55 = arith.cmpf ole, %8, %54 : vector<1x256xf32>
    %cst_17 = arith.constant 1.000000e+00 : f32
    %56 = vector.broadcast %cst_17 : f32 to vector<1x256xf32>
    %57 = arith.cmpf oge, %11, %56 : vector<1x256xf32>
    %58 = arith.andi %55, %57 : vector<1x256xi1>
    %cst_18 = arith.constant 0.000000e+00 : f32
    %59 = vector.shape_cast %58 : vector<1x256xi1> to vector<1x256xi1>
    %60 = vector.broadcast %59 : vector<1x256xi1> to vector<4x256xi1>
    %61 = vector.broadcast %cst_18 : f32 to vector<4x256xf32>
    %62 = arith.select %60, %53, %61 : vector<4x256xi1>, vector<4x256xf32>
    %c240_i32 = arith.constant 240 : i32
    %63 = tpu.dynamic_rotate %1 by %c240_i32 dim 1 : vector<4x256xf32>, i32 -> vector<4x256xf32>
    %cst_19 = arith.constant 1.400000e+01 : f32
    %64 = vector.broadcast %cst_19 : f32 to vector<1x256xf32>
    %65 = arith.cmpf ole, %8, %64 : vector<1x256xf32>
    %cst_20 = arith.constant 0.000000e+00 : f32
    %66 = vector.shape_cast %65 : vector<1x256xi1> to vector<1x256xi1>
    %67 = vector.broadcast %66 : vector<1x256xi1> to vector<4x256xi1>
    %68 = vector.broadcast %cst_20 : f32 to vector<4x256xf32>
    %69 = arith.select %67, %63, %68 : vector<4x256xi1>, vector<4x256xf32>
    %c239_i32 = arith.constant 239 : i32
    %70 = tpu.dynamic_rotate %1 by %c239_i32 dim 1 : vector<4x256xf32>, i32 -> vector<4x256xf32>
    %cst_21 = arith.constant 1.400000e+01 : f32
    %71 = vector.broadcast %cst_21 : f32 to vector<1x256xf32>
    %72 = arith.cmpf ole, %8, %71 : vector<1x256xf32>
    %cst_22 = arith.constant 1.400000e+01 : f32
    %73 = vector.broadcast %cst_22 : f32 to vector<1x256xf32>
    %74 = arith.cmpf ole, %11, %73 : vector<1x256xf32>
    %75 = arith.andi %72, %74 : vector<1x256xi1>
    %cst_23 = arith.constant 0.000000e+00 : f32
    %76 = vector.shape_cast %75 : vector<1x256xi1> to vector<1x256xi1>
    %77 = vector.broadcast %76 : vector<1x256xi1> to vector<4x256xi1>
    %78 = vector.broadcast %cst_23 : f32 to vector<4x256xf32>
    %79 = arith.select %77, %70, %78 : vector<4x256xi1>, vector<4x256xf32>
    %80 = tpu.concatenate %21, %28, %38, %45, %1, %52, %62, %69, %79 in 0 : vector<4x256xf32>, vector<4x256xf32>, vector<4x256xf32>, vector<4x256xf32>, vector<4x256xf32>, vector<4x256xf32>, vector<4x256xf32>, vector<4x256xf32>, vector<4x256xf32> -> vector<36x256xf32>
    %c0_24 = arith.constant 0 : index
    %c0_25 = arith.constant 0 : index
    %81 = vector.load %arg2[%c0_24, %c0_25] : memref<32x36xf32, #tpu.memory_space<vmem>>, vector<32x36xf32>
    %cst_26 = arith.constant dense<0.000000e+00> : vector<32x256xf32>
    %82 = tpu.matmul %81, %80, %cst_26 {dimension_numbers = #tpu.dot_dimension_numbers<[1], [0], [0], [1], [0, 0, 1, 1], [], []>} : vector<32x36xf32>, vector<36x256xf32>, vector<32x256xf32> -> vector<32x256xf32>
    %c0_27 = arith.constant 0 : index
    %c0_28 = arith.constant 0 : index
    %83 = vector.load %arg3[%c0_27, %c0_28] : memref<32x1xf32, #tpu.memory_space<vmem>>, vector<32x1xf32>
    %84 = vector.broadcast %83 : vector<32x1xf32> to vector<32x256xf32>
    %85 = arith.addf %82, %84 : vector<32x256xf32>
    %cst_29 = arith.constant 0.000000e+00 : f32
    %86 = vector.broadcast %cst_29 : f32 to vector<32x256xf32>
    %87 = arith.maximumf %85, %86 : vector<32x256xf32>
    %c0_30 = arith.constant 0 : index
    %c0_31 = arith.constant 0 : index
    %88 = vector.load %arg4[%c0_30, %c0_31] : memref<4x32xf32, #tpu.memory_space<vmem>>, vector<4x32xf32>
    %cst_32 = arith.constant dense<0.000000e+00> : vector<4x256xf32>
    %89 = tpu.matmul %88, %87, %cst_32 {dimension_numbers = #tpu.dot_dimension_numbers<[1], [0], [0], [1], [0, 0, 1, 1], [], []>} : vector<4x32xf32>, vector<32x256xf32>, vector<4x256xf32> -> vector<4x256xf32>
    %c0_33 = arith.constant 0 : index
    %c0_34 = arith.constant 0 : index
    %c0_35 = arith.constant 0 : index
    %90 = vector.load %arg5[%c0_33, %c0_34, %c0_35] : memref<1x4x256xf32, #tpu.memory_space<vmem>>, vector<1x4x256xf32>
    %91 = vector.shape_cast %90 : vector<1x4x256xf32> to vector<4x256xf32>
    %92 = vector.shape_cast %89 : vector<4x256xf32> to vector<1x4x256xf32>
    tpu.vector_store %arg5[%c0_33, %c0_34, %c0_35], %92 {strides = array<i32>} : memref<1x4x256xf32, #tpu.memory_space<vmem>>, vector<1x4x256xf32>,
    return
  }
  func.func @transform_0(%arg0: i32) -> (i32, i32, i32) {
    %c0_i32 = arith.constant 0 : i32
    %c0_i32_0 = arith.constant 0 : i32
    %c0_i32_1 = arith.constant 0 : i32
    return %arg0, %c0_i32, %c0_i32_0 : i32, i32, i32
  }
  func.func @transform_1(%arg0: i32) -> (i32, i32) {
    %c0_i32 = arith.constant 0 : i32
    %c0_i32_0 = arith.constant 0 : i32
    %c0_i32_1 = arith.constant 0 : i32
    return %c0_i32, %c0_i32_0 : i32, i32
  }
  func.func @transform_2(%arg0: i32) -> (i32, i32) {
    %c0_i32 = arith.constant 0 : i32
    %c0_i32_0 = arith.constant 0 : i32
    %c0_i32_1 = arith.constant 0 : i32
    return %c0_i32, %c0_i32_0 : i32, i32
  }
  func.func @transform_3(%arg0: i32) -> (i32, i32) {
    %c0_i32 = arith.constant 0 : i32
    %c0_i32_0 = arith.constant 0 : i32
    %c0_i32_1 = arith.constant 0 : i32
    return %c0_i32, %c0_i32_0 : i32, i32
  }
  func.func @transform_4(%arg0: i32) -> (i32, i32, i32) {
    %c0_i32 = arith.constant 0 : i32
    %c0_i32_0 = arith.constant 0 : i32
    %c0_i32_1 = arith.constant 0 : i32
    return %arg0, %c0_i32, %c0_i32_0 : i32, i32, i32
  }
}

</mosaic_0001>

<llo_original>
// kernel: tpu_custom_call.1
$region0: #{tpu_custom_call.1}
  #allocation0 [shape = 'u32[]', space=smem, size = 0x4, offset = 0x4, fixed_abs, tag = 'smem constant byte address 0x4 - core index']
  #allocation1 [shape = 'u32[144,128]{1,0:T(1,128)}', space=vmem, size = 0x12000, scoped, tag = 'internal scratch']
  %s0 = inlined_call_operand.hbm [shape: f32[2,4,256], index: 0, kind: input, shape index: {}]
  %s1 = inlined_call_operand.vmem [shape: f32[32,36], index: 1, kind: input, shape index: {}]
  %s2 = inlined_call_operand.vmem [shape: f32[32,1], index: 2, kind: input, shape index: {}]
  %s3 = inlined_call_operand.vmem [shape: f32[4,32], index: 3, kind: input, shape index: {}]
  %s4 = inlined_call_operand.hbm [shape: f32[2,4,256], index: 4, kind: output, shape index: {}]
  %s5 = sld [smem:[#allocation0]]
  $region53: #{tpu_custom_call.1} parent=0
    _
  %s7 = ssub.s32 1, %s5
  %s8 = scalar_select 0, %s7, %s5
  $region1: #{tpu_custom_call.1} parent=0
    #allocation2 [shape = 'u8[8192]{0}', space=vmem, size = 0x2000, scoped, tag = 'input window, operand 0']
    #allocation3 [shape = 's32[2]{0}', space=sflag, size = 0x8, scoped, tag = 'scoped memory for tpu_custom_call.1']
    #allocation4 [shape = 's32[2]{0}', space=sflag, size = 0x8, scoped, tag = 'scoped memory for tpu_custom_call.1']
    #allocation5 [shape = 'u8[8192]{0}', space=vmem, size = 0x2000, scoped, tag = 'output window, operand 0']
    %9 = vsyncpa [#allocation3], 0
    %s10 = scalar_lea.sflag [#allocation3], 1
    %11 = vsyncpa %s10, 0
    %12 = vsyncpa [#allocation4], 0
    %s13 = scalar_lea.sflag [#allocation4], 1
    %14 = vsyncpa %s13, 0
    loop: start=0, step=1, limit=4
    $region2: #{tpu_custom_call.1} parent=1 // loop_pre_header
      _
    $region3: #{tpu_custom_call.1} parent=1 // loop_header
      %s16 = sphi 0, %s20
      %p17 = scmp.ge.s32.totalorder %s16, 4
      %s26 = sphi 0, %s28
      %s29 = sphi 0, %s26
      %s30 = sphi 0, %s29
      %s46 = sphi 0, %s30
      %s50 = sphi 0, %s50
      %s52 = sphi 0, %s50
      %s53 = sphi 0, %s52
      %s67 = sphi 0, %s53
      %s71 = sphi 0, %s71
      %s73 = sphi 0, %s71
      %s74 = sphi 0, %s73
      %s88 = sphi 0, %s74
      %s92 = sphi 0, %s92
      %s94 = sphi 0, %s92
      %s95 = sphi 0, %s94
      %s109 = sphi 0, %s95
      %s115 = sphi 0, %s117
      %s118 = sphi 0, %s115
      %s119 = sphi 0, %s118
      %s135 = sphi 0, %s119
    $region4: #{tpu_custom_call.1} parent=1 // loop_header_branch
      %19 = sbr.rel (%p17) target = $region8
    $region5: #{tpu_custom_call.1} parent=1 // loop_body
      %s21 = ssub.s32 %s16, 1
      %s22 = ssub.s32 %s16, 2
      %s23 = sadd.s32 %s16, 1
      %s24 = ssub.s32 %s16, %s23
      %p25 = scmp.eq.s32.totalorder %s24, 0
      %s27 = sadd.s32 %s26, 1
      %s28 = scalar_select %p25, %s26, %s27
      %p31 = pneg %p25
      %p32 = scmp.eq.s32.totalorder %s16, 1
      %p33 = por %p31, %p32
      %p34 = scmp.ne.s32.totalorder %s26, %s29
      %p35 = scmp.eq.s32.totalorder %s16, 0
      %p36 = por %p34, %p35
      %p37 = scmp.ne.s32.totalorder %s26, %s29
      %p38 = scmp.eq.s32.totalorder %s21, 1
      %p39 = por %p37, %p38
      %p40 = scmp.ne.s32.totalorder %s29, %s30
      %p41 = scmp.eq.s32.totalorder %s21, 0
      %p42 = por %p40, %p41
      %p43 = scmp.ne.s32.totalorder %s29, %s30
      %p44 = scmp.eq.s32.totalorder %s22, 1
      %p45 = por %p43, %p44
      %p47 = scmp.ne.s32.totalorder %s30, %s46
      %p48 = scmp.eq.s32.totalorder %s22, 0
      %p49 = por %p47, %p48
      %s51 = sadd.s32 %s50, 1
      %p54 = scmp.eq.s32.totalorder %s16, 1
      %p55 = scmp.ne.s32.totalorder %s50, %s52
      %p56 = scmp.eq.s32.totalorder %s16, 0
      %p57 = por %p55, %p56
      %p58 = scmp.ne.s32.totalorder %s50, %s52
      %p59 = scmp.eq.s32.totalorder %s21, 1
      %p60 = por %p58, %p59
      %p61 = scmp.ne.s32.totalorder %s52, %s53
      %p62 = scmp.eq.s32.totalorder %s21, 0
      %p63 = por %p61, %p62
      %p64 = scmp.ne.s32.totalorder %s52, %s53
      %p65 = scmp.eq.s32.totalorder %s22, 1
      %p66 = por %p64, %p65
      %p68 = scmp.ne.s32.totalorder %s53, %s67
      %p69 = scmp.eq.s32.totalorder %s22, 0
      %p70 = por %p68, %p69
      %s72 = sadd.s32 %s71, 1
      %p75 = scmp.eq.s32.totalorder %s16, 1
      %p76 = scmp.ne.s32.totalorder %s71, %s73
      %p77 = scmp.eq.s32.totalorder %s16, 0
      %p78 = por %p76, %p77
      %p79 = scmp.ne.s32.totalorder %s71, %s73
      %p80 = scmp.eq.s32.totalorder %s21, 1
      %p81 = por %p79, %p80
      %p82 = scmp.ne.s32.totalorder %s73, %s74
      %p83 = scmp.eq.s32.totalorder %s21, 0
      %p84 = por %p82, %p83
      %p85 = scmp.ne.s32.totalorder %s73, %s74
      %p86 = scmp.eq.s32.totalorder %s22, 1
      %p87 = por %p85, %p86
      %p89 = scmp.ne.s32.totalorder %s74, %s88
      %p90 = scmp.eq.s32.totalorder %s22, 0
      %p91 = por %p89, %p90
      %s93 = sadd.s32 %s92, 1
      %p96 = scmp.eq.s32.totalorder %s16, 1
      %p97 = scmp.ne.s32.totalorder %s92, %s94
      %p98 = scmp.eq.s32.totalorder %s16, 0
      %p99 = por %p97, %p98
      %p100 = scmp.ne.s32.totalorder %s92, %s94
      %p101 = scmp.eq.s32.totalorder %s21, 1
      %p102 = por %p100, %p101
      %p103 = scmp.ne.s32.totalorder %s94, %s95
      %p104 = scmp.eq.s32.totalorder %s21, 0
      %p105 = por %p103, %p104
      %p106 = scmp.ne.s32.totalorder %s94, %s95
      %p107 = scmp.eq.s32.totalorder %s22, 1
      %p108 = por %p106, %p107
      %p110 = scmp.ne.s32.totalorder %s95, %s109
      %p111 = scmp.eq.s32.totalorder %s22, 0
      %p112 = por %p110, %p111
      %s113 = ssub.s32 %s16, %s23
      %p114 = scmp.eq.s32.totalorder %s113, 0
      %s116 = sadd.s32 %s115, 1
      %s117 = scalar_select %p114, %s115, %s116
      %p120 = pneg %p114
      %p121 = scmp.eq.s32.totalorder %s16, 1
      %p122 = por %p120, %p121
      %p123 = scmp.ne.s32.totalorder %s115, %s118
      %p124 = scmp.eq.s32.totalorder %s16, 0
      %p125 = por %p123, %p124
      %p126 = scmp.ne.s32.totalorder %s115, %s118
      %p127 = scmp.eq.s32.totalorder %s21, 1
      %p128 = por %p126, %p127
      %p129 = scmp.ne.s32.totalorder %s118, %s119
      %p130 = scmp.eq.s32.totalorder %s21, 0
      %p131 = por %p129, %p130
      %p132 = scmp.ne.s32.totalorder %s118, %s119
      %p133 = scmp.eq.s32.totalorder %s22, 1
      %p134 = por %p132, %p133
      %p136 = scmp.ne.s32.totalorder %s119, %s135
      %p137 = scmp.eq.s32.totalorder %s22, 0
      %p138 = por %p136, %p137
      %p139 = scmp.le.s32.totalorder 1, %s16
      %p140 = scmp.lt.s32.totalorder %s16, 3
      %p141 = pnand %p139, %p140
      %p142 = pneg %p141
      // Predicated region
      $region9: #{tpu_custom_call.1} parent=5 // pred_check
        _
      $region10: #{tpu_custom_call.1} parent=5 // pred_check_branch
        %144 = sbr.rel (%p141) target = $region12
      $region11: #{tpu_custom_call.1} parent=5 // pred_region
        %s145 = ssub.s32 %s16, 1
        // Predicated region
        $region13: #{tpu_custom_call.1} parent=11 // pred_check
          %p146 = pneg %p63
        $region14: #{tpu_custom_call.1} parent=11 // pred_check_branch
          %148 = sbr.rel (%p146) target = $region16
        $region15: #{tpu_custom_call.1} parent=11 // pred_region
          _
        $region16: #{tpu_custom_call.1} parent=11 // pred_fallthru
          _
        // Predicated region
        $region17: #{tpu_custom_call.1} parent=11 // pred_check
          %p149 = pneg %p84
        $region18: #{tpu_custom_call.1} parent=11 // pred_check_branch
          %151 = sbr.rel (%p149) target = $region20
        $region19: #{tpu_custom_call.1} parent=11 // pred_region
          _
        $region20: #{tpu_custom_call.1} parent=11 // pred_fallthru
          _
        // Predicated region
        $region21: #{tpu_custom_call.1} parent=11 // pred_check
          %p152 = pneg %p105
        $region22: #{tpu_custom_call.1} parent=11 // pred_check_branch
          %154 = sbr.rel (%p152) target = $region24
        $region23: #{tpu_custom_call.1} parent=11 // pred_region
          _
        $region24: #{tpu_custom_call.1} parent=11 // pred_fallthru
          _
      $region12: #{tpu_custom_call.1} parent=5 // pred_fallthru
        _
      %p155 = scmp.lt.s32.totalorder %s16, 2
      // Predicated region
      $region25: #{tpu_custom_call.1} parent=5 // pred_check
        %p156 = pneg %p155
      $region26: #{tpu_custom_call.1} parent=5 // pred_check_branch
        %158 = sbr.rel (%p156) target = $region28
      $region27: #{tpu_custom_call.1} parent=5 // pred_region
        // Predicated region
        $region29: #{tpu_custom_call.1} parent=27 // pred_check
          %p159 = pneg %p36
        $region30: #{tpu_custom_call.1} parent=27 // pred_check_branch
          %161 = sbr.rel (%p159) target = $region32
        $region31: #{tpu_custom_call.1} parent=27 // pred_region
          %s162 = sand.u32 %s26, 1
          %s163 = scalar_lea.sflag [#allocation3], %s162
          %s164 = sand.u32 %s26, 1
          %s165 = smul.addr %s164, 8
          %s166 = scalar_lea.vmem [#allocation2], %s165
          %s168 = ssub.s32 128, 128
          %169 = vsyncadd %s163, %s168
          %s170 = smul.addr %s16, 2
          %s171 = smul.addr %s170, 64
          %s172 = scalar_lea.hbm %s0, %s171
          %s174 = sshll.u32 %s166, 4
          %s175 = int_to_ptr.vmem [resolvable:$true] %s174
          %177 = dma.hbm_to_vmem [thread:$0]  %s172, 128, %s175, %s163
        $region32: #{tpu_custom_call.1} parent=27 // pred_fallthru
          _
      $region28: #{tpu_custom_call.1} parent=5 // pred_fallthru
        _
      %p178 = scmp.le.s32.totalorder 1, %s16
      %p179 = scmp.lt.s32.totalorder %s16, 3
      %p180 = pnand %p178, %p179
      %p181 = pneg %p180
      // Predicated region
      $region33: #{tpu_custom_call.1} parent=5 // pred_check
        _
      $region34: #{tpu_custom_call.1} parent=5 // pred_check_branch
        %183 = sbr.rel (%p180) target = $region36
      $region35: #{tpu_custom_call.1} parent=5 // pred_region
        %s184 = ssub.s32 %s16, 1
        %s185 = sand.u32 %s29, 1
        %s186 = scalar_lea.sflag [#allocation3], %s185
        %s187 = sand.u32 %s29, 1
        %s188 = smul.addr %s187, 8
        %s189 = scalar_lea.vmem [#allocation2], %s188
        // Predicated region
        $region37: #{tpu_custom_call.1} parent=35 // pred_check
          %p190 = pneg %p42
        $region38: #{tpu_custom_call.1} parent=35 // pred_check_branch
          %192 = sbr.rel (%p190) target = $region40
        $region39: #{tpu_custom_call.1} parent=35 // pred_region
          %193 = dma.done %s186, 128
        $region40: #{tpu_custom_call.1} parent=35 // pred_fallthru
          _
        %s194 = sand.u32 %s29, 1
        %s195 = scalar_lea.sflag [#allocation3], %s194
        %s196 = sand.u32 %s29, 1
        %s197 = smul.addr %s196, 8
        %s198 = scalar_lea.vmem [#allocation2], %s197
        %p199 = pneg %p42
        %p200 = pneg %p39
        %p201 = pneg %p63
        %p202 = pneg %p60
        %p203 = pneg %p84
        %p204 = pneg %p81
        %p205 = pneg %p105
        %p206 = pneg %p102
        %p207 = pneg %p131
        %p208 = pneg %p128
        %s209 = sand.u32 %s118, 1
        %s210 = scalar_lea.sflag [#allocation4], %s209
        %s211 = sand.u32 %s118, 1
        %s212 = smul.addr %s211, 8
        %s213 = scalar_lea.vmem [#allocation5], %s212
        %v214 = vld [vmem:[%s189] sm:$0xff]
        %v215 = vlaneseq
        %v216 = vand.u32 %v215, 127
        %v217 = vadd.s32 %v216, 128
        %v218 = vcvt.s32.f32 %v216
        %v219 = vcvt.s32.f32 %v217
        %v220 = vadd.f32 %v218, 0.5
        %v221 = vadd.f32 %v219, 0.5
        %v222 = vmul.f32 %v220, 0.0625
        %v223 = vmul.f32 %v221, 0.0625
        %v224 = vfloor.f32 %v222
        %v225 = vfloor.f32 %v223
        %v226 = vmul.f32 %v224, 16.0
        %v227 = vmul.f32 %v225, 16.0
        %v228 = vsub.f32 %v218, %v226
        %v229 = vsub.f32 %v219, %v227
        %v231 = vcombine.high %v214, %v214
        %233 = vrot.lane.b32.xlu0 %v214, 17
        %v234 = vpop.permute.xlu0 %233
        %235 = vrot.lane.b32.xlu0 %v231, 17
        %v236 = vpop.permute.xlu0 %235
        %vm237 = vcmp.lt.s32.totalorder %v216, 17
        %v238 = vsel %vm237, %v234, %v236
        %v239 = vsel %vm237, %v236, %v234
        %vm240 = vcmp.ge.f32.partialorder %v224, 1.0
        %vm241 = vcmp.ge.f32.partialorder %v225, 1.0
        %vm242 = vcmp.ge.f32.partialorder %v228, 1.0
        %vm243 = vcmp.ge.f32.partialorder %v229, 1.0
        %vm244 = vmand %vm240, %vm242
        %vm245 = vmand %vm241, %vm243
        %v246 = vsel %vm244, 1, 0
        %v247 = vsel %vm245, 1, 0
        %vm248 = vcmp.eq.s32.totalorder %v246, 1
        %vm249 = vcmp.eq.s32.totalorder %v247, 1
        %v250 = vsel %vm248, %v239, 0.0
        %v251 = vsel %vm249, %v238, 0.0
        %252 = vrot.lane.b32.xlu0 %v214, 16
        %v253 = vpop.permute.xlu0 %252
        %254 = vrot.lane.b32.xlu0 %v231, 16
        %v255 = vpop.permute.xlu0 %254
        %vm256 = vcmp.lt.s32.totalorder %v216, 16
        %v257 = vsel %vm256, %v253, %v255
        %v258 = vsel %vm256, %v255, %v253
        %v259 = vsel %vm240, 1, 0
        %v260 = vsel %vm241, 1, 0
        %vm261 = vcmp.eq.s32.totalorder %v259, 1
        %vm262 = vcmp.eq.s32.totalorder %v260, 1
        %v263 = vsel %vm261, %v258, 0.0
        %v264 = vsel %vm262, %v257, 0.0
        %265 = vrot.lane.b32.xlu0 %v214, 15
        %v266 = vpop.permute.xlu0 %265
        %267 = vrot.lane.b32.xlu0 %v231, 15
        %v268 = vpop.permute.xlu0 %267
        %vm269 = vcmp.lt.s32.totalorder %v216, 15
        %v270 = vsel %vm269, %v266, %v268
        %v271 = vsel %vm269, %v268, %v266
        %vm272 = vcmp.le.f32.partialorder %v228, 14.0
        %vm273 = vcmp.le.f32.partialorder %v229, 14.0
        %vm274 = vmand %vm240, %vm272
        %vm275 = vmand %vm241, %vm273
        %v276 = vsel %vm274, 1, 0
        %v277 = vsel %vm275, 1, 0
        %vm278 = vcmp.eq.s32.totalorder %v276, 1
        %vm279 = vcmp.eq.s32.totalorder %v277, 1
        %v280 = vsel %vm278, %v271, 0.0
        %v281 = vsel %vm279, %v270, 0.0
        %282 = vrot.lane.b32.xlu0 %v214, 1
        %v283 = vpop.permute.xlu0 %282
        %284 = vrot.lane.b32.xlu0 %v231, 1
        %v285 = vpop.permute.xlu0 %284
        %vm286 = vcmp.lt.s32.totalorder %v216, 1
        %v287 = vsel %vm286, %v283, %v285
        %v288 = vsel %vm286, %v285, %v283
        %v289 = vsel %vm242, 1, 0
        %v290 = vsel %vm243, 1, 0
        %vm291 = vcmp.eq.s32.totalorder %v289, 1
        %vm292 = vcmp.eq.s32.totalorder %v290, 1
        %v293 = vsel %vm291, %v288, 0.0
        %v294 = vsel %vm292, %v287, 0.0
        %295 = vrot.lane.b32.xlu0 %v214, 127
        %v296 = vpop.permute.xlu0 %295
        %297 = vrot.lane.b32.xlu0 %v231, 127
        %v298 = vpop.permute.xlu0 %297
        %vm299 = vcmp.lt.s32.totalorder %v216, 127
        %v300 = vsel %vm299, %v296, %v298
        %v301 = vsel %vm299, %v298, %v296
        %v302 = vsel %vm272, 1, 0
        %v303 = vsel %vm273, 1, 0
        %vm304 = vcmp.eq.s32.totalorder %v302, 1
        %vm305 = vcmp.eq.s32.totalorder %v303, 1
        %v306 = vsel %vm304, %v300, 0.0
        %v307 = vsel %vm305, %v301, 0.0
        %308 = vrot.lane.b32.xlu0 %v214, 113
        %v309 = vpop.permute.xlu0 %308
        %310 = vrot.lane.b32.xlu0 %v231, 113
        %v311 = vpop.permute.xlu0 %310
        %vm312 = vcmp.lt.s32.totalorder %v216, 113
        %v313 = vsel %vm312, %v309, %v311
        %v314 = vsel %vm312, %v311, %v309
        %vm315 = vcmp.le.f32.partialorder %v224, 14.0
        %vm316 = vcmp.le.f32.partialorder %v225, 14.0
        %vm317 = vmand %vm315, %vm242
        %vm318 = vmand %vm316, %vm243
        %v319 = vsel %vm317, 1, 0
        %v320 = vsel %vm318, 1, 0
        %vm321 = vcmp.eq.s32.totalorder %v319, 1
        %vm322 = vcmp.eq.s32.totalorder %v320, 1
        %v323 = vsel %vm321, %v313, 0.0
        %v324 = vsel %vm322, %v314, 0.0
        %325 = vrot.lane.b32.xlu0 %v214, 112
        %v326 = vpop.permute.xlu0 %325
        %327 = vrot.lane.b32.xlu0 %v231, 112
        %v328 = vpop.permute.xlu0 %327
        %vm329 = vcmp.lt.s32.totalorder %v216, 112
        %v330 = vsel %vm329, %v326, %v328
        %v331 = vsel %vm329, %v328, %v326
        %v332 = vsel %vm315, 1, 0
        %v333 = vsel %vm316, 1, 0
        %vm334 = vcmp.eq.s32.totalorder %v332, 1
        %vm335 = vcmp.eq.s32.totalorder %v333, 1
        %v336 = vsel %vm334, %v330, 0.0
        %v337 = vsel %vm335, %v331, 0.0
        %338 = vrot.lane.b32.xlu0 %v214, 111
        %v339 = vpop.permute.xlu0 %338
        %340 = vrot.lane.b32.xlu0 %v231, 111
        %v341 = vpop.permute.xlu0 %340
        %vm342 = vcmp.lt.s32.totalorder %v216, 111
        %v343 = vsel %vm342, %v339, %v341
        %v344 = vsel %vm342, %v341, %v339
        %vm345 = vmand %vm315, %vm272
        %vm346 = vmand %vm316, %vm273
        %v347 = vsel %vm345, 1, 0
        %v348 = vsel %vm346, 1, 0
        %vm349 = vcmp.eq.s32.totalorder %v347, 1
        %vm350 = vcmp.eq.s32.totalorder %v348, 1
        %v351 = vsel %vm349, %v343, 0.0
        %v352 = vsel %vm350, %v344, 0.0
        %v355 = vrot.slane %v263, 4
        %v356 = vrot.slane %v264, 4
        %v361 = vrot.slane %v293, 4
        %v362 = vrot.slane %v294, 4
        %v367 = vrot.slane %v306, 4
        %v368 = vrot.slane %v307, 4
        %v373 = vrot.slane %v336, 4
        %v374 = vrot.slane %v337, 4
        %vm377 = vcmask 1043456
        %v378 = vsel %vm377, %v250, %v355
        %v379 = vsel %vm377, %v251, %v356
        %v380 = vsel %vm377, %v280, %v361
        %v381 = vsel %vm377, %v281, %v362
        %v382 = vsel %vm377, %v214, %v367
        %v383 = vsel %vm377, %v231, %v368
        %v384 = vsel %vm377, %v323, %v373
        %v385 = vsel %vm377, %v324, %v374
        %v386 = vld [vmem:[%s1] sm:$0xff]
        %v387 = vld [vmem:[%s1 + $0x8] sm:$0xff]
        %v388 = vld [vmem:[%s1 + $0x10] sm:$0xff]
        %v389 = vld [vmem:[%s1 + $0x18] sm:$0xff]
        %v390 = vld [vmem:[%s2] sm:$0xff]
        %v391 = vld [vmem:[%s2 + $0x8] sm:$0xff]
        %v392 = vld [vmem:[%s2 + $0x10] sm:$0xff]
        %v393 = vld [vmem:[%s2 + $0x18] sm:$0xff]
        %395 = vset.pattern.permute.xlu0 0
        %396 = vperm.xlu0 %395, %v390
        %v397 = vpop.permute.xlu0 %396
        %400 = vset.pattern.permute.xlu0 0
        %401 = vperm.xlu0 %400, %v391
        %v402 = vpop.permute.xlu0 %401
        %405 = vset.pattern.permute.xlu0 0
        %406 = vperm.xlu0 %405, %v392
        %v407 = vpop.permute.xlu0 %406
        %410 = vset.pattern.permute.xlu0 0
        %411 = vperm.xlu0 %410, %v393
        %v412 = vpop.permute.xlu0 %411
        %vm414 = vcmask 293888
        %v416 = vsel %vm414, %v386, 0
        %v419 = vsel %vm414, %v387, 0
        %v422 = vsel %vm414, %v388, 0
        %v425 = vsel %vm414, %v389, 0
        %v428 = vsel %vm377, %v351, 0
        %v431 = vsel %vm377, %v352, 0
        %433 = vmatprep.subr.mxu0 0.0
        %434 = vmatpush1.msra.mxu0 0.0
        %435 = vmatprep.subr.mxu0 0.0
        %436 = vmatpush1.msra.mxu0 0.0
        %437 = vmatprep.subr.mxu0 0.0
        %438 = vmatpush1.msra.mxu0 0.0
        %439 = vmatprep.subr.mxu0 0.0
        %440 = vmatpush1.msra.mxu0 0.0
        %441 = vmatprep.subr.mxu0 0.0
        %442 = vmatpush1.msra.mxu0 0.0
        %443 = vmatprep.subr.mxu0 0.0
        %444 = vmatpush1.msra.mxu0 0.0
        %445 = vmatprep.subr.mxu0 0.0
        %446 = vmatpush1.msra.mxu0 0.0
        %447 = vmatprep.subr.mxu0 0.0
        %448 = vmatpush1.msra.mxu0 0.0
        %449 = vmatprep.subr.mxu0 0.0
        %450 = vmatpush1.msra.mxu0 0.0
        %451 = vmatprep.subr.mxu0 0.0
        %452 = vmatpush1.msra.mxu0 0.0
        %453 = vmatprep.subr.mxu0 0.0
        %454 = vmatpush1.msra.mxu0 0.0
        %455 = vmatprep.subr.mxu0 %v431
        %456 = vmatpush1.msra.mxu0 %v428
        %457 = vmatprep.subr.mxu0 %v385
        %458 = vmatpush1.msra.mxu0 %v384
        %459 = vmatprep.subr.mxu0 %v383
        %460 = vmatpush1.msra.mxu0 %v382
        %461 = vmatprep.subr.mxu0 %v381
        %462 = vmatpush1.msra.mxu0 %v380
        %463 = vmatprep.subr.mxu0 %v379
        %464 = vmatpush1.msra.mxu0 %v378
        %465 = vmatprep.subr.mxu0 0.0
        %466 = vmatpush2.msra.mxu0 0.0
        %467 = vmatprep.subr.mxu0 0.0
        %468 = vmatpush2.msra.mxu0 0.0
        %469 = vmatprep.subr.mxu0 0.0
        %470 = vmatpush2.msra.mxu0 0.0
        %471 = vmatprep.subr.mxu0 0.0
        %472 = vmatpush2.msra.mxu0 0.0
        %473 = vmatprep.subr.mxu0 0.0
        %474 = vmatpush2.msra.mxu0 0.0
        %475 = vmatprep.subr.mxu0 0.0
        %476 = vmatpush2.msra.mxu0 0.0
        %477 = vmatprep.subr.mxu0 0.0
        %478 = vmatpush2.msra.mxu0 0.0
        %479 = vmatprep.subr.mxu0 0.0
        %480 = vmatpush2.msra.mxu0 0.0
        %481 = vmatprep.subr.mxu0 0.0
        %482 = vmatpush2.msra.mxu0 0.0
        %483 = vmatprep.subr.mxu0 0.0
        %484 = vmatpush2.msra.mxu0 0.0
        %485 = vmatprep.subr.mxu0 0.0
        %486 = vmatpush2.msra.mxu0 0.0
        %487 = vmatprep.subr.mxu0 0.0
        %488 = vmatpush2.msra.mxu0 0.0
        %489 = vmatprep.subr.mxu0 0.0
        %490 = vmatpush2.msra.mxu0 0.0
        %491 = vmatprep.subr.mxu0 0.0
        %492 = vmatpush2.msra.mxu0 0.0
        %493 = vmatprep.subr.mxu0 0.0
        %494 = vmatpush2.msra.mxu0 0.0
        %495 = vmatprep.subr.mxu0 0.0
        %496 = vmatpush2.msra.mxu0 0.0
        %497 = vmatprep.mubr.f32.mxu0 0.0
        %498 = vmatmul.mubr.f32.gmra.mxu0 %v416
        %v499 = vpop.f32.mrf.mxu0
        %v500 = vadd.f32 %v397, %v499
        %v501 = vpop.f32.mrf.mxu0
        %v502 = vadd.f32 %v397, %v501
        %503 = vmatprep.mubr.f32.mxu0 0.0
        %504 = vmatmul.mubr.f32.gmra.mxu0 %v419
        %v505 = vpop.f32.mrf.mxu0
        %v506 = vadd.f32 %v402, %v505
        %v507 = vpop.f32.mrf.mxu0
        %v508 = vadd.f32 %v402, %v507
        %509 = vmatprep.mubr.f32.mxu0 0.0
        %510 = vmatmul.mubr.f32.gmra.mxu0 %v422
        %v511 = vpop.f32.mrf.mxu0
        %v512 = vadd.f32 %v407, %v511
        %v513 = vpop.f32.mrf.mxu0
        %v514 = vadd.f32 %v407, %v513
        %515 = vmatprep.mubr.f32.mxu0 0.0
        %516 = vmatmul.mubr.f32.gmra.mxu0 %v425
        %v517 = vpop.f32.mrf.mxu0
        %v518 = vadd.f32 %v412, %v517
        %v519 = vpop.f32.mrf.mxu0
        %v520 = vadd.f32 %v412, %v519
        %521 = vdwg.mxu0
        %v522 = vmax.f32 %v500, 0.0
        %v523 = vmax.f32 %v502, 0.0
        %v524 = vmax.f32 %v506, 0.0
        %v525 = vmax.f32 %v508, 0.0
        %v526 = vmax.f32 %v512, 0.0
        %v527 = vmax.f32 %v514, 0.0
        %v528 = vmax.f32 %v518, 0.0
        %v529 = vmax.f32 %v520, 0.0
        %v530 = vld [vmem:[%s3] sm:$0xf]
        %vm531 = vcmask 261120
        %v533 = vsel %vm531, %v530, 0
        %535 = vmatprep.subr.mxu0 0.0
        %536 = vmatpush1.msra.mxu0 0.0
        %537 = vmatprep.subr.mxu0 0.0
        %538 = vmatpush1.msra.mxu0 0.0
        %539 = vmatprep.subr.mxu0 0.0
        %540 = vmatpush1.msra.mxu0 0.0
        %541 = vmatprep.subr.mxu0 0.0
        %542 = vmatpush1.msra.mxu0 0.0
        %543 = vmatprep.subr.mxu0 0.0
        %544 = vmatpush1.msra.mxu0 0.0
        %545 = vmatprep.subr.mxu0 0.0
        %546 = vmatpush1.msra.mxu0 0.0
        %547 = vmatprep.subr.mxu0 0.0
        %548 = vmatpush1.msra.mxu0 0.0
        %549 = vmatprep.subr.mxu0 0.0
        %550 = vmatpush1.msra.mxu0 0.0
        %551 = vmatprep.subr.mxu0 0.0
        %552 = vmatpush1.msra.mxu0 0.0
        %553 = vmatprep.subr.mxu0 0.0
        %554 = vmatpush1.msra.mxu0 0.0
        %555 = vmatprep.subr.mxu0 0.0
        %556 = vmatpush1.msra.mxu0 0.0
        %557 = vmatprep.subr.mxu0 0.0
        %558 = vmatpush1.msra.mxu0 0.0
        %559 = vmatprep.subr.mxu0 %v529
        %560 = vmatpush1.msra.mxu0 %v528
        %561 = vmatprep.subr.mxu0 %v527
        %562 = vmatpush1.msra.mxu0 %v526
        %563 = vmatprep.subr.mxu0 %v525
        %564 = vmatpush1.msra.mxu0 %v524
        %565 = vmatprep.subr.mxu0 %v523
        %566 = vmatpush1.msra.mxu0 %v522
        %567 = vmatprep.subr.mxu0 0.0
        %568 = vmatpush2.msra.mxu0 0.0
        %569 = vmatprep.subr.mxu0 0.0
        %570 = vmatpush2.msra.mxu0 0.0
        %571 = vmatprep.subr.mxu0 0.0
        %572 = vmatpush2.msra.mxu0 0.0
        %573 = vmatprep.subr.mxu0 0.0
        %574 = vmatpush2.msra.mxu0 0.0
        %575 = vmatprep.subr.mxu0 0.0
        %576 = vmatpush2.msra.mxu0 0.0
        %577 = vmatprep.subr.mxu0 0.0
        %578 = vmatpush2.msra.mxu0 0.0
        %579 = vmatprep.subr.mxu0 0.0
        %580 = vmatpush2.msra.mxu0 0.0
        %581 = vmatprep.subr.mxu0 0.0
        %582 = vmatpush2.msra.mxu0 0.0
        %583 = vmatprep.subr.mxu0 0.0
        %584 = vmatpush2.msra.mxu0 0.0
        %585 = vmatprep.subr.mxu0 0.0
        %586 = vmatpush2.msra.mxu0 0.0
        %587 = vmatprep.subr.mxu0 0.0
        %588 = vmatpush2.msra.mxu0 0.0
        %589 = vmatprep.subr.mxu0 0.0
        %590 = vmatpush2.msra.mxu0 0.0
        %591 = vmatprep.subr.mxu0 0.0
        %592 = vmatpush2.msra.mxu0 0.0
        %593 = vmatprep.subr.mxu0 0.0
        %594 = vmatpush2.msra.mxu0 0.0
        %595 = vmatprep.subr.mxu0 0.0
        %596 = vmatpush2.msra.mxu0 0.0
        %597 = vmatprep.subr.mxu0 0.0
        %598 = vmatpush2.msra.mxu0 0.0
        %599 = vmatprep.mubr.f32.mxu0 0.0
        %600 = vmatmul.mubr.f32.gmra.mxu0 %v533
        %v601 = vpop.f32.mrf.mxu0
        %v602 = vadd.f32 0.0, %v601
        %v603 = vpop.f32.mrf.mxu0
        %v604 = vadd.f32 0.0, %v603
        %605 = vdwg.mxu0
        %v608 = vcombine.low %v602, %v604
        %610 = vst [vmem:[%s213] sm:$0xff] %v608
        %s611 = sand.u32 %s118, 1
        %s612 = scalar_lea.sflag [#allocation4], %s611
        %s613 = sand.u32 %s118, 1
        %s614 = smul.addr %s613, 8
        %s615 = scalar_lea.vmem [#allocation5], %s614
        // Predicated region
        $region41: #{tpu_custom_call.1} parent=35 // pred_check
          %p616 = pneg %p128
        $region42: #{tpu_custom_call.1} parent=35 // pred_check_branch
          %618 = sbr.rel (%p616) target = $region44
        $region43: #{tpu_custom_call.1} parent=35 // pred_region
          %s620 = ssub.s32 128, 128
          %621 = vsyncadd %s612, %s620
          %s622 = smul.addr %s21, 2
          %s623 = smul.addr %s622, 64
          %s624 = scalar_lea.hbm %s4, %s623
          %s626 = sshll.u32 %s615, 4
          %s627 = int_to_ptr.vmem [resolvable:$true] %s626
          %629 = dma.vmem_to_hbm [thread:$0]  %s627, 128, %s624, %s612
        $region44: #{tpu_custom_call.1} parent=35 // pred_fallthru
          _
      $region36: #{tpu_custom_call.1} parent=5 // pred_fallthru
        _
      %p630 = scmp.le.s32.totalorder 2, %s16
      // Predicated region
      $region45: #{tpu_custom_call.1} parent=5 // pred_check
        %p631 = pneg %p630
      $region46: #{tpu_custom_call.1} parent=5 // pred_check_branch
        %633 = sbr.rel (%p631) target = $region48
      $region47: #{tpu_custom_call.1} parent=5 // pred_region
        %s634 = ssub.s32 %s16, 2
        // Predicated region
        $region49: #{tpu_custom_call.1} parent=47 // pred_check
          %p635 = pneg %p134
        $region50: #{tpu_custom_call.1} parent=47 // pred_check_branch
          %637 = sbr.rel (%p635) target = $region52
        $region51: #{tpu_custom_call.1} parent=47 // pred_region
          %s638 = sand.u32 %s119, 1
          %s639 = scalar_lea.sflag [#allocation4], %s638
          %s640 = sand.u32 %s119, 1
          %s641 = smul.addr %s640, 8
          %s642 = scalar_lea.vmem [#allocation5], %s641
          %643 = dma.done %s639, 128
        $region52: #{tpu_custom_call.1} parent=47 // pred_fallthru
          _
      $region48: #{tpu_custom_call.1} parent=5 // pred_fallthru
        _
    $region6: #{tpu_custom_call.1} parent=1 // loop_footer
      %s20 = sadd.s32 1, %s16
    $region7: #{tpu_custom_call.1} parent=1 // loop_footer_branch
      %15 = sbr.rel target = $region3
    $region8: #{tpu_custom_call.1} parent=1 // loop_exit
      _
    %644 = vsyncpa [#allocation3], 1
    %s645 = scalar_lea.sflag [#allocation3], 1
    %646 = vsyncpa %s645, 1
    %647 = vsyncpa [#allocation4], 1
    %s648 = scalar_lea.sflag [#allocation4], 1
    %649 = vsyncpa %s648, 1

</llo_original>
